<compile_context>
chip_gen: v5e
topology: v5e:2x2
jax: 0.10.0
libtpu: 0.0.40
codegen_flags: <defaults>
</compile_context>

<pallas_src>
import math

import jax
import jax.numpy as jnp
from jax.experimental import pallas as pl
from jax.experimental.pallas import tpu as pltpu

_LANES = 128          # vreg lane width
_SUBLANES = 8         # vreg sublane height
_LOG_PI = math.log(math.pi)
_DEFAULT_TILE_ROWS = 2048


def _round_up(v, m):
    return ((v + m - 1) // m) * m


def _make_kernel(inv_batch, const_term):
    # Plain Python floats -> become jaxpr literals (no captured constants).
    inv_b = float(inv_batch)
    const = float(const_term)

    def kernel(a_ref, m_ref, s_ref, o_ref, acc_ref):
        i = pl.program_id(0)

        a = a_ref[...].astype(jnp.float32)
        m = m_ref[...].astype(jnp.float32)
        s = s_ref[...].astype(jnp.float32)

        d = a - m
        # "Variable" part of the per-element log-likelihood:
        #   -0.5 * ((a-m)^2 / std^2 + 2*log(std))
        # The constant -log(pi) per *real* element is added analytically at
        # finalize, so neutral padding (a=m=0, std=1) contributes exactly 0.
        v = -0.5 * (d * d) / (s * s) - jnp.log(s)

        # Per-lane partial sums for this tile (sublane reduce only).
        partial = jnp.sum(v, axis=0, keepdims=True)          # (1, LANES)

        @pl.when(i == 0)
        def _():
            acc_ref[...] = partial

        @pl.when(i > 0)
        def _():
            acc_ref[...] = acc_ref[...] + partial

        @pl.when(i == pl.num_programs(0) - 1)
        def _():
            # loss = -(sum_variable + sum_constant) / B
            #      = -sum_variable / B + A * log(pi)
            total = jnp.sum(acc_ref[...], keepdims=True)      # (1, 1)
            o_ref[...] = const - total * inv_b

    return kernel


def gaussian_bc_loss(x, action, mean, std, *, tile_rows=_DEFAULT_TILE_ROWS):
    """Pallas implementation of GaussianBCLoss.forward(x, action, mean, std)."""
    del x  # unused by the reference module's forward
    B, A = action.shape
    n = B * A

    # Lane-dense re-layout: flatten to 1D and reshape to (rows, 128).
    rows = pl.cdiv(n, _LANES)
    tb = _round_up(min(int(tile_rows), _round_up(rows, _SUBLANES)), _SUBLANES)
    rows_p = _round_up(rows, tb)
    total = rows_p * _LANES
    pad = total - n

    def _flat(v, pad_value):
        flat = jnp.reshape(v, (-1,))
        if pad:
            flat = jnp.concatenate(
                [flat, jnp.full((pad,), pad_value, dtype=flat.dtype)])
        return flat.reshape(rows_p, _LANES)

    a2 = _flat(action, 0)   # padded (a - m) = 0
    m2 = _flat(mean, 0)
    s2 = _flat(std, 1)      # padded log(std) = 0, divide by 1

    num_tiles = rows_p // tb
    kernel = _make_kernel(1.0 / B, A * _LOG_PI)

    out = pl.pallas_call(
        kernel,
        out_shape=jax.ShapeDtypeStruct((1, 1), jnp.float32),
        grid=(num_tiles,),
        in_specs=[
            pl.BlockSpec((tb, _LANES), lambda i: (i, 0)),
            pl.BlockSpec((tb, _LANES), lambda i: (i, 0)),
            pl.BlockSpec((tb, _LANES), lambda i: (i, 0)),
        ],
        out_specs=pl.BlockSpec((1, 1), lambda i: (0, 0)),
        scratch_shapes=[pltpu.VMEM((1, _LANES), jnp.float32)],
        compiler_params=pltpu.CompilerParams(
            dimension_semantics=("arbitrary",)),
    )(a2, m2, s2)
    return out[0, 0]


def gaussian_bc_loss_ref(x, action, mean, std):
    """Pure-JAX reference (mirrors the PyTorch code exactly)."""
    del x
    var = std ** 2
    ll = -0.5 * ((action - mean) ** 2 / var
                 + 2.0 * jnp.log(std)
                 + 2.0 * jnp.log(jnp.float32(math.pi)))
    log_prob = jnp.sum(ll, axis=1)
    return -jnp.mean(log_prob)


if __name__ == "__main__":
    key = jax.random.PRNGKey(0)
    k_x, k_a, k_m, k_s = jax.random.split(key, 4)

    # Small shapes consistent with a BC-loss forward.
    B, OBS, ACT = 8, 32, 8
    x = jax.random.normal(k_x, (B, OBS), dtype=jnp.float32)        # unused
    action = jax.random.normal(k_a, (B, ACT), dtype=jnp.float32)
    mean = jax.random.normal(k_m, (B, ACT), dtype=jnp.float32)
    std = jax.random.uniform(k_s, (B, ACT), dtype=jnp.float32,
                             minval=0.1, maxval=1.0)

    loss = gaussian_bc_loss(x, action, mean, std)
    jax.block_until_ready(loss)
    ref = gaussian_bc_loss_ref(x, action, mean, std)
    assert jnp.allclose(loss, ref, rtol=1e-5, atol=1e-5), (loss, ref)

    # Larger case exercising the multi-tile accumulation path (forced small tile).
    B2, ACT2 = 512, 24
    k_a2, k_m2, k_s2 = jax.random.split(k_s, 3)
    action2 = jax.random.normal(k_a2, (B2, ACT2), dtype=jnp.float32)
    mean2 = jax.random.normal(k_m2, (B2, ACT2), dtype=jnp.float32)
    std2 = jax.random.uniform(k_s2, (B2, ACT2), dtype=jnp.float32,
                              minval=0.1, maxval=1.0)
    loss2 = gaussian_bc_loss(None, action2, mean2, std2, tile_rows=8)
    jax.block_until_ready(loss2)
    ref2 = gaussian_bc_loss_ref(None, action2, mean2, std2)
    assert jnp.allclose(loss2, ref2, rtol=1e-4, atol=1e-4), (loss2, ref2)

    print("KERNEL_OK")
</pallas_src>

<mosaic_0001>
module attributes {stable_mosaic.version = 11 : i64} {
  func.func @kernel(%arg0: i32, %arg1: memref<8x128xf32, #tpu.memory_space<vmem>>, %arg2: memref<8x128xf32, #tpu.memory_space<vmem>>, %arg3: memref<8x128xf32, #tpu.memory_space<vmem>>, %arg4: memref<1x1xf32, #tpu.memory_space<vmem>>, %arg5: memref<1x128xf32, #tpu.memory_space<vmem>>) attributes {dimension_semantics = [#tpu.dimension_semantics<arbitrary>], iteration_bounds = array<i64: 1>, scalar_prefetch = 0 : i64, scratch_operands = 1 : i64, tpu.core_type = #tpu.core_type<tc>, window_params = [{transform_indices = @transform_0, window_bounds = array<i64: 8, 128>}, {transform_indices = @transform_1, window_bounds = array<i64: 8, 128>}, {transform_indices = @transform_2, window_bounds = array<i64: 8, 128>}, {pipeline_mode = #tpu.pipeline_mode<synchronous>, transform_indices = @transform_3, window_bounds = array<i64: 1, 1>}]} {
    %c0 = arith.constant 0 : index
    %c0_0 = arith.constant 0 : index
    %0 = vector.load %arg1[%c0, %c0_0] : memref<8x128xf32, #tpu.memory_space<vmem>>, vector<8x128xf32>
    %c0_1 = arith.constant 0 : index
    %c0_2 = arith.constant 0 : index
    %1 = vector.load %arg2[%c0_1, %c0_2] : memref<8x128xf32, #tpu.memory_space<vmem>>, vector<8x128xf32>
    %c0_3 = arith.constant 0 : index
    %c0_4 = arith.constant 0 : index
    %2 = vector.load %arg3[%c0_3, %c0_4] : memref<8x128xf32, #tpu.memory_space<vmem>>, vector<8x128xf32>
    %3 = arith.subf %0, %1 : vector<8x128xf32>
    %4 = arith.mulf %3, %3 : vector<8x128xf32>
    %cst = arith.constant -5.000000e-01 : f32
    %5 = vector.broadcast %cst : f32 to vector<8x128xf32>
    %6 = arith.mulf %5, %4 : vector<8x128xf32>
    %7 = arith.mulf %2, %2 : vector<8x128xf32>
    %8 = arith.divf %6, %7 : vector<8x128xf32>
    %9 = math.log %2 : vector<8x128xf32>
    %10 = arith.subf %8, %9 : vector<8x128xf32>
    %cst_5 = arith.constant dense<0.000000e+00> : vector<128xf32>
    %11 = vector.multi_reduction <add>, %10, %cst_5 [0] : vector<8x128xf32> to vector<128xf32>
    %12 = vector.shape_cast %11 : vector<128xf32> to vector<1x128xf32>
    %c0_i32 = arith.constant 0 : i32
    %13 = arith.cmpi eq, %arg0, %c0_i32 : i32
    %14 = arith.extui %13 : i1 to i32
    %c0_i32_6 = arith.constant 0 : i32
    %15 = arith.cmpi ne, %14, %c0_i32_6 : i32
    scf.if %15 {
      %c0_11 = arith.constant 0 : index
      %c0_12 = arith.constant 0 : index
      %22 = vector.load %arg5[%c0_11, %c0_12] : memref<1x128xf32, #tpu.memory_space<vmem>>, vector<1x128xf32>
      tpu.vector_store %arg5[%c0_11, %c0_12], %12 {strides = array<i32>} : memref<1x128xf32, #tpu.memory_space<vmem>>, vector<1x128xf32>,
    } else {
    }
    %c0_i32_7 = arith.constant 0 : i32
    %16 = arith.cmpi sgt, %arg0, %c0_i32_7 : i32
    %17 = arith.extui %16 : i1 to i32
    %c0_i32_8 = arith.constant 0 : i32
    %18 = arith.cmpi ne, %17, %c0_i32_8 : i32
    scf.if %18 {
      %c0_11 = arith.constant 0 : index
      %c0_12 = arith.constant 0 : index
      %22 = vector.load %arg5[%c0_11, %c0_12] : memref<1x128xf32, #tpu.memory_space<vmem>>, vector<1x128xf32>
      %23 = arith.addf %22, %12 : vector<1x128xf32>
      %c0_13 = arith.constant 0 : index
      %c0_14 = arith.constant 0 : index
      %24 = vector.load %arg5[%c0_13, %c0_14] : memref<1x128xf32, #tpu.memory_space<vmem>>, vector<1x128xf32>
      tpu.vector_store %arg5[%c0_13, %c0_14], %23 {strides = array<i32>} : memref<1x128xf32, #tpu.memory_space<vmem>>, vector<1x128xf32>,
    } else {
    }
    %c0_i32_9 = arith.constant 0 : i32
    %19 = arith.cmpi eq, %arg0, %c0_i32_9 : i32
    %20 = arith.extui %19 : i1 to i32
    %c0_i32_10 = arith.constant 0 : i32
    %21 = arith.cmpi ne, %20, %c0_i32_10 : i32
    scf.if %21 {
      %c0_11 = arith.constant 0 : index
      %c0_12 = arith.constant 0 : index
      %22 = vector.load %arg5[%c0_11, %c0_12] : memref<1x128xf32, #tpu.memory_space<vmem>>, vector<1x128xf32>
      %23 = vector.shape_cast %22 : vector<1x128xf32> to vector<1x1x128xf32>
      %cst_13 = arith.constant dense<0.000000e+00> : vector<1xf32>
      %24 = vector.multi_reduction <add>, %23, %cst_13 [1, 2] : vector<1x1x128xf32> to vector<1xf32>
      %25 = vector.shape_cast %24 : vector<1xf32> to vector<1x1x1xf32>
      %26 = vector.extract %25[0, 0, 0] : f32 from vector<1x1x1xf32>
      %27 = vector.broadcast %26 : f32 to vector<1x1xf32>
      %cst_14 = arith.constant 1.250000e-01 : f32
      %28 = vector.broadcast %cst_14 : f32 to vector<1x1xf32>
      %29 = arith.mulf %27, %28 : vector<1x1xf32>
      %cst_15 = arith.constant 9.15783882 : f32
      %30 = vector.broadcast %cst_15 : f32 to vector<1x1xf32>
      %31 = arith.subf %30, %29 : vector<1x1xf32>
      %c0_16 = arith.constant 0 : index
      %c0_17 = arith.constant 0 : index
      %32 = vector.load %arg4[%c0_16, %c0_17] : memref<1x1xf32, #tpu.memory_space<vmem>>, vector<1x1xf32>
      tpu.vector_store %arg4[%c0_16, %c0_17], %31 {strides = array<i32>} : memref<1x1xf32, #tpu.memory_space<vmem>>, vector<1x1xf32>,
    } else {
    }
    return
  }
  func.func @transform_0(%arg0: i32) -> (i32, i32) {
    %c0_i32 = arith.constant 0 : i32
    %c0_i32_0 = arith.constant 0 : i32
    return %arg0, %c0_i32 : i32, i32
  }
  func.func @transform_1(%arg0: i32) -> (i32, i32) {
    %c0_i32 = arith.constant 0 : i32
    %c0_i32_0 = arith.constant 0 : i32
    return %arg0, %c0_i32 : i32, i32
  }
  func.func @transform_2(%arg0: i32) -> (i32, i32) {
    %c0_i32 = arith.constant 0 : i32
    %c0_i32_0 = arith.constant 0 : i32
    return %arg0, %c0_i32 : i32, i32
  }
  func.func @transform_3(%arg0: i32) -> (i32, i32) {
    %c0_i32 = arith.constant 0 : i32
    %c0_i32_0 = arith.constant 0 : i32
    %c0_i32_1 = arith.constant 0 : i32
    return %c0_i32, %c0_i32_0 : i32, i32
  }
}

</mosaic_0001>

<llo_original>
// kernel: tpu_custom_call.1
$region0: #{tpu_custom_call.1}
  #allocation0 [shape = 'u32[]', space=smem, size = 0x4, offset = 0x4, fixed_abs, tag = 'smem constant byte address 0x4 - core index']
  #allocation1 [shape = 'u32[72,128]{1,0:T(1,128)}', space=vmem, size = 0x9000, scoped, tag = 'internal scratch']
  #allocation2 [shape = 'f32[1,128]{1,0:T(1,128)}', space=vmem, size = 0x200, scoped, tag = 'scratch operand']
  %s0 = inlined_call_operand.hbm [shape: f32[8,128], index: 0, kind: input, shape index: {}]
  %s1 = inlined_call_operand.hbm [shape: f32[8,128], index: 1, kind: input, shape index: {}]
  %s2 = inlined_call_operand.hbm [shape: f32[8,128], index: 2, kind: input, shape index: {}]
  %s3 = inlined_call_operand.hbm [shape: f32[1,1], index: 3, kind: output, shape index: {}]
  %s4 = sld [smem:[#allocation0]]
  $region46: #{tpu_custom_call.1} parent=0
    _
  %s6 = ssub.s32 1, %s4
  %s7 = scalar_select 0, %s6, %s4
  $region1: #{tpu_custom_call.1} parent=0
    #allocation3 [shape = 'u8[4096]{0}', space=vmem, size = 0x1000, scoped, tag = 'input window, operand 0, single buffered']
    #allocation4 [shape = 's32[1]{0}', space=sflag, size = 0x4, scoped, tag = 'scoped memory for tpu_custom_call.1']
    #allocation5 [shape = 's32[1]{0}', space=sflag, size = 0x4, scoped, tag = 'scoped memory for tpu_custom_call.1']
    #allocation6 [shape = 'u8[4096]{0}', space=vmem, size = 0x1000, scoped, tag = 'input window, operand 1, single buffered']
    #allocation7 [shape = 's32[1]{0}', space=sflag, size = 0x4, scoped, tag = 'scoped memory for tpu_custom_call.1']
    #allocation8 [shape = 'u8[4096]{0}', space=vmem, size = 0x1000, scoped, tag = 'input window, operand 2, single buffered']
    #allocation9 [shape = 'u8[512]{0}', space=vmem, size = 0x400, scoped, tag = 'output window, operand 0, single buffered']
    %8 = vsyncpa [#allocation4], 0
    %9 = vsyncpa [#allocation7], 0
    %10 = vsyncpa [#allocation5], 0
    // Predicated region
    $region2: #{tpu_custom_call.1} parent=1 // pred_check
      _
    $region3: #{tpu_custom_call.1} parent=1 // pred_check_branch
      %12 = sbr.rel (0) target = $region5
    $region4: #{tpu_custom_call.1} parent=1 // pred_region
      %14 = vsyncadd [#allocation4], 0
      %s16 = sshll.u32 %s0, 4
      %s17 = int_to_ptr.hbm [resolvable:$true] %s16
      %s18 = sshll.u32 [#allocation3], 4
      %s19 = int_to_ptr.vmem [resolvable:$true] %s18
      %21 = dma.hbm_to_vmem [thread:$0]  %s17, 128, %s19, [#allocation4]
    $region5: #{tpu_custom_call.1} parent=1 // pred_fallthru
      _
    // Predicated region
    $region6: #{tpu_custom_call.1} parent=1 // pred_check
      _
    $region7: #{tpu_custom_call.1} parent=1 // pred_check_branch
      %23 = sbr.rel (0) target = $region9
    $region8: #{tpu_custom_call.1} parent=1 // pred_region
      %25 = vsyncadd [#allocation7], 0
      %s27 = sshll.u32 %s1, 4
      %s28 = int_to_ptr.hbm [resolvable:$true] %s27
      %s29 = sshll.u32 [#allocation6], 4
      %s30 = int_to_ptr.vmem [resolvable:$true] %s29
      %32 = dma.hbm_to_vmem [thread:$0]  %s28, 128, %s30, [#allocation7]
    $region9: #{tpu_custom_call.1} parent=1 // pred_fallthru
      _
    // Predicated region
    $region10: #{tpu_custom_call.1} parent=1 // pred_check
      _
    $region11: #{tpu_custom_call.1} parent=1 // pred_check_branch
      %34 = sbr.rel (0) target = $region13
    $region12: #{tpu_custom_call.1} parent=1 // pred_region
      %36 = vsyncadd [#allocation7], 0
      %s38 = sshll.u32 %s2, 4
      %s39 = int_to_ptr.hbm [resolvable:$true] %s38
      %s40 = sshll.u32 [#allocation8], 4
      %s41 = int_to_ptr.vmem [resolvable:$true] %s40
      %43 = dma.hbm_to_vmem [thread:$0]  %s39, 128, %s41, [#allocation7]
    $region13: #{tpu_custom_call.1} parent=1 // pred_fallthru
      _
    // Predicated region
    $region14: #{tpu_custom_call.1} parent=1 // pred_check
      _
    $region15: #{tpu_custom_call.1} parent=1 // pred_check_branch
      %45 = sbr.rel (0) target = $region17
    $region16: #{tpu_custom_call.1} parent=1 // pred_region
      %47 = dma.done [#allocation4], 128
    $region17: #{tpu_custom_call.1} parent=1 // pred_fallthru
      _
    // Predicated region
    $region18: #{tpu_custom_call.1} parent=1 // pred_check
      _
    $region19: #{tpu_custom_call.1} parent=1 // pred_check_branch
      %49 = sbr.rel (0) target = $region21
    $region20: #{tpu_custom_call.1} parent=1 // pred_region
      %51 = dma.done [#allocation7], 128
    $region21: #{tpu_custom_call.1} parent=1 // pred_fallthru
      _
    // Predicated region
    $region22: #{tpu_custom_call.1} parent=1 // pred_check
      _
    $region23: #{tpu_custom_call.1} parent=1 // pred_check_branch
      %53 = sbr.rel (0) target = $region25
    $region24: #{tpu_custom_call.1} parent=1 // pred_region
      %55 = dma.done [#allocation7], 128
    $region25: #{tpu_custom_call.1} parent=1 // pred_fallthru
      _
    %v56 = vld [vmem:[#allocation3] sm:$0xff]
    %v57 = vld [vmem:[#allocation6] sm:$0xff]
    %v58 = vld [vmem:[#allocation8] sm:$0xff]
    %v59 = vsub.f32 %v56, %v57
    %v60 = vmul.f32 %v59, %v59
    %v61 = vmul.f32 %v60, -0.5
    %v62 = vmul.f32 %v58, %v58
    %v63 = vrcp.pop %v62
    %v64 = vmul.f32 %v62, %v63
    %v65 = vsub.f32 1.0, %v64
    %v66 = vmul.f32 %v63, %v65
    %v67 = vadd.f32 %v63, %v66
    %vm68 = vweird.f32 %v62
    %vm69 = vweird.f32 %v63
    %vm70 = vmor %vm68, %vm69
    %v71 = vsel %vm70, %v63, %v67
    %v72 = vand.u32 2147483647, %v62
    %vm73 = vcmp.eq.f32.partialorder %v72, 8.507059e+37
    %v74 = vand.u32 %v62, 2147483648
    %v75 = vor.u32 1.1754944e-38, %v74
    %v76 = vsel %vm73, %v75, %v71
    %v77 = vmul.f32 %v61, %v76
    %v78 = vlog2.pop %v58
    %v79 = vmul.f32 %v78, 0.6931472
    %v80 = vsub.f32 %v77, %v79
    %v81 = vrot.slane %v80, 4
    %v82 = vadd.f32 %v80, %v81
    %v83 = vrot.slane %v82, 2
    %v84 = vadd.f32 %v82, %v83
    %v85 = vrot.slane %v84, 1
    %v86 = vadd.f32 %v84, %v85
    %p87 = scmp.eq.s32.totalorder 0, 0
    // Predicated region
    $region26: #{tpu_custom_call.1} parent=1 // pred_check
      %p88 = pneg %p87
    $region27: #{tpu_custom_call.1} parent=1 // pred_check_branch
      %90 = sbr.rel (%p88) target = $region29
    $region28: #{tpu_custom_call.1} parent=1 // pred_region
      %91 = vst [vmem:[#allocation2] sm:$0x1] %v86
    $region29: #{tpu_custom_call.1} parent=1 // pred_fallthru
      _
    %p92 = scmp.gt.s32.totalorder 0, 0
    // Predicated region
    $region30: #{tpu_custom_call.1} parent=1 // pred_check
      %p93 = pneg %p92
    $region31: #{tpu_custom_call.1} parent=1 // pred_check_branch
      %95 = sbr.rel (%p93) target = $region33
    $region32: #{tpu_custom_call.1} parent=1 // pred_region
      %v96 = vld [vmem:[#allocation2] sm:$0x1]
      %v97 = vadd.f32 %v96, %v86
      %98 = vst [vmem:[#allocation2] sm:$0x1] %v97
    $region33: #{tpu_custom_call.1} parent=1 // pred_fallthru
      _
    // Predicated region
    $region34: #{tpu_custom_call.1} parent=1 // pred_check
      %p99 = pneg %p87
    $region35: #{tpu_custom_call.1} parent=1 // pred_check_branch
      %101 = sbr.rel (%p99) target = $region37
    $region36: #{tpu_custom_call.1} parent=1 // pred_region
      %v102 = vld [vmem:[#allocation2] sm:$0x1]
      %vm103 = vcmask 1040384
      %v104 = vsel %vm103, %v102, 0.0
      %105 = vadd.xlane.f32.xlu0 %v104
      %v106 = vpop.xlane.xlu0 %105
      %v107 = vrot.slane %v106, 4
      %v108 = vadd.f32 %v106, %v107
      %v109 = vrot.slane %v108, 2
      %v110 = vadd.f32 %v108, %v109
      %v111 = vrot.slane %v110, 1
      %v112 = vadd.f32 %v110, %v111
      %s113 = vtos %v112
      %v114 = vstv %s113
      %v115 = vmul.f32 %v114, 0.125
      %v116 = vsub.f32 9.157839, %v115
      %vm117 = vcmask 0
      %118 = vst.msk [vmem:[#allocation9] sm:$0x1] %vm117, %v116
    $region37: #{tpu_custom_call.1} parent=1 // pred_fallthru
      _
    // Predicated region
    $region38: #{tpu_custom_call.1} parent=1 // pred_check
      _
    $region39: #{tpu_custom_call.1} parent=1 // pred_check_branch
      %120 = sbr.rel (0) target = $region41
    $region40: #{tpu_custom_call.1} parent=1 // pred_region
      %122 = vsyncadd [#allocation5], 0
      %s124 = sshll.u32 [#allocation9], 4
      %s125 = int_to_ptr.vmem [resolvable:$true] %s124
      %s126 = sshll.u32 %s3, 4
      %s127 = int_to_ptr.hbm [resolvable:$true] %s126
      %129 = dma.vmem_to_hbm [thread:$0]  %s125, 16, %s127, [#allocation5]
    $region41: #{tpu_custom_call.1} parent=1 // pred_fallthru
      _
    // Predicated region
    $region42: #{tpu_custom_call.1} parent=1 // pred_check
      _
    $region43: #{tpu_custom_call.1} parent=1 // pred_check_branch
      %131 = sbr.rel (0) target = $region45
    $region44: #{tpu_custom_call.1} parent=1 // pred_region
      %133 = dma.done [#allocation5], 16
    $region45: #{tpu_custom_call.1} parent=1 // pred_fallthru
      _
    %134 = vsyncpa [#allocation4], 1
    %135 = vsyncpa [#allocation7], 1
    %136 = vsyncpa [#allocation5], 1

</llo_original>
